<compile_context>
chip_gen: v7x
topology: tpu7x:2x2x1
jax: 0.10.0
libtpu: 0.0.40
codegen_flags: <defaults>
</compile_context>

<pallas_src>
import functools

import jax
import jax.numpy as jnp
from jax import lax
from jax.experimental import pallas as pl
from jax.experimental.pallas import tpu as pltpu

BN_EPS = 1e-5
_LANE = 128
_SUBLANE = 8


def _round_up(v, m):
    return ((v + m - 1) // m) * m


def _vmem_caps():
    """Generation-aware VMEM sizing: (tiling budget, compiler vmem limit)."""
    try:
        cap = pltpu.get_tpu_info().vmem_capacity_bytes
    except Exception:
        cap = 64 * 1024 * 1024  # conservative (v7x-sized) fallback
    budget = min(cap // 2, 64 * 1024 * 1024)        # 32 MiB on v7x, 64 MiB on v5e/v6e
    limit = min(int(cap * 0.72), 96 * 1024 * 1024)  # ~46 MiB on v7x, ~92 MiB on v5e/v6e
    return budget, limit


def _choose_tm(m, c_in_pad, h_pad, c_out_pad, weight_bytes, budget_bytes):
    """Row-tile size keeping the phase-2 live VMEM footprint inside `budget_bytes`."""
    # Resident params: W1/W2 single-buffered (pl.Buffered(1)), small vectors, plus
    # the phase-1 Gram/sum accumulator outputs, plus Mosaic internal headroom.
    fixed = (weight_bytes * (c_in_pad * h_pad + h_pad * c_out_pad)
             + 4 * (8 * h_pad + 2 * c_out_pad)
             + 4 * 2 * (c_in_pad * c_in_pad + c_in_pad)
             + 2 * 1024 * 1024)
    # Per row: double-buffered x tile, double-buffered out tile, live [TM, H] temps.
    per_row = 4 * (2 * c_in_pad + 2 * c_out_pad + 2 * h_pad)
    tm = (budget_bytes - fixed) // max(per_row, 1)
    tm = int(max(_LANE, min(tm, 2048)))
    tm = (tm // _SUBLANE) * _SUBLANE
    if m <= tm:
        return max(_SUBLANE, _round_up(m, _SUBLANE))
    return tm


def _stats_kernel(x_ref, g_ref, s_ref, *, mxu_dtype):
    """Phase 1 per row tile: G += x^T @ x (MXU) and s += colsum(x).

    x_ref: [TM, C_in_pad]     g_ref: [C_in_pad, C_in_pad] (resident accumulator)
    s_ref: [1, C_in_pad] (resident accumulator)
    """
    @pl.when(pl.program_id(0) == 0)
    def _():
        g_ref[...] = jnp.zeros_like(g_ref)
        s_ref[...] = jnp.zeros_like(s_ref)

    xf = x_ref[...].astype(jnp.float32)
    xm = xf.astype(mxu_dtype)
    # Gram accumulation on the MXU (transposed-LHS contraction), f32 accumulator.
    g_ref[...] += lax.dot_general(xm, xm, (((0,), (0,)), ((), ())),
                                  preferred_element_type=jnp.float32)
    s_ref[...] += jnp.sum(xf, axis=0, keepdims=True)


def _apply_kernel(x_ref, w1_ref, scale_ref, shift_ref, w2_ref, b2_ref, o_ref, *,
                  mxu_dtype):
    """Phase 2: h = x @ W1; h = relu(h * scale + shift); out = h @ W2 + b2."""
    x = x_ref[...].astype(mxu_dtype)
    h = jnp.dot(x, w1_ref[...], preferred_element_type=jnp.float32)
    h = jnp.maximum(h * scale_ref[...] + shift_ref[...], 0.0)
    out = jnp.dot(h.astype(mxu_dtype), w2_ref[...],
                  preferred_element_type=jnp.float32) + b2_ref[...]
    o_ref[...] = out.astype(o_ref.dtype)


@functools.partial(jax.jit, static_argnames=("use_bf16_matmul",))
def project_mlp_forward(x, w1, b1, gamma, beta, w2, b2, *, use_bf16_matmul=False):
    """x: [B, L, C_in] or [B, C_in].  Returns float32 with the same leading shape."""
    del b1  # cancels exactly under training-mode BatchNorm (batch-mean subtraction)

    add_dim = (x.ndim == 2)
    if add_dim:
        x = x[:, None, :]
    B, L, C_in = x.shape
    H = w1.shape[1]
    C_out = w2.shape[1]
    M = B * L

    f32 = jnp.float32
    mxu_dtype = jnp.bfloat16 if use_bf16_matmul else f32
    weight_bytes = 2 if use_bf16_matmul else 4

    C_in_pad = _round_up(C_in, _LANE)
    H_pad = _round_up(H, _LANE)
    C_out_pad = _round_up(C_out, _LANE)

    budget, vmem_limit = _vmem_caps()
    TM = _choose_tm(M, C_in_pad, H_pad, C_out_pad, weight_bytes, budget)
    M_pad = _round_up(M, TM)
    num_tiles = M_pad // TM

    # Padding is exact: zero rows contribute nothing to G/s (no conv1 bias), and
    # zero input channels hit zero-padded rows of W1.
    x_flat = x.reshape(M, C_in)
    x_flat = jnp.pad(x_flat, ((0, M_pad - M), (0, C_in_pad - C_in)))

    w1_p = jnp.pad(w1.astype(f32), ((0, C_in_pad - C_in), (0, H_pad - H)))
    gamma_p = jnp.pad(gamma.reshape(1, H).astype(f32), ((0, 0), (0, H_pad - H)))
    beta_p = jnp.pad(beta.reshape(1, H).astype(f32), ((0, 0), (0, H_pad - H)))
    w2_p = jnp.pad(w2.astype(f32), ((0, H_pad - H), (0, C_out_pad - C_out)))
    b2_p = jnp.pad(b2.reshape(1, C_out).astype(f32), ((0, 0), (0, C_out_pad - C_out)))

    # Single-buffered spec for operands whose block index never changes.
    resident = functools.partial(pl.BlockSpec, pipeline_mode=pl.Buffered(1))

    # ---- Phase 1: stream x tiles, accumulate Gram matrix + column sums ----------
    gram, colsum = pl.pallas_call(
        functools.partial(_stats_kernel, mxu_dtype=mxu_dtype),
        out_shape=(jax.ShapeDtypeStruct((C_in_pad, C_in_pad), f32),
                   jax.ShapeDtypeStruct((1, C_in_pad), f32)),
        grid=(num_tiles,),
        in_specs=[pl.BlockSpec((TM, C_in_pad), lambda i: (i, 0))],
        out_specs=(pl.BlockSpec((C_in_pad, C_in_pad), lambda i: (0, 0)),
                   pl.BlockSpec((1, C_in_pad), lambda i: (0, 0))),
        compiler_params=pltpu.CompilerParams(
            dimension_semantics=("arbitrary",),
            vmem_limit_bytes=vmem_limit),
    )(x_flat)

    # ---- Fold Gram stats + gamma/beta into per-channel BN scale/shift -----------
    # O(C_in * H) once; negligible vs. the streamed row passes, done in plain XLA.
    sum_h = colsum @ w1_p                                          # [1, H_pad]
    sumsq_h = jnp.sum(w1_p * (gram @ w1_p), axis=0, keepdims=True)  # [1, H_pad]
    mean = sum_h * (1.0 / M)
    var = jnp.maximum(sumsq_h * (1.0 / M) - mean * mean, 0.0)
    scale = gamma_p * lax.rsqrt(var + BN_EPS)
    shift = beta_p - mean * scale

    w1_mxu = w1_p.astype(mxu_dtype)
    w2_mxu = w2_p.astype(mxu_dtype)

    # ---- Phase 2: normalize + ReLU + second matmul, tiled & megacore-parallel ---
    out_pad = pl.pallas_call(
        functools.partial(_apply_kernel, mxu_dtype=mxu_dtype),
        out_shape=jax.ShapeDtypeStruct((M_pad, C_out_pad), f32),
        grid=(num_tiles,),
        in_specs=[
            pl.BlockSpec((TM, C_in_pad), lambda i: (i, 0)),
            resident((C_in_pad, H_pad), lambda i: (0, 0)),
            resident((1, H_pad), lambda i: (0, 0)),
            resident((1, H_pad), lambda i: (0, 0)),
            resident((H_pad, C_out_pad), lambda i: (0, 0)),
            resident((1, C_out_pad), lambda i: (0, 0)),
        ],
        out_specs=pl.BlockSpec((TM, C_out_pad), lambda i: (i, 0)),
        compiler_params=pltpu.CompilerParams(
            dimension_semantics=("parallel",),
            vmem_limit_bytes=vmem_limit),
    )(x_flat, w1_mxu, scale, shift, w2_mxu, b2_p)

    out = out_pad[:M, :C_out].reshape(B, L, C_out)
    if add_dim:
        out = out[:, 0, :]
    return out


def _reference_forward(x, w1, b1, gamma, beta, w2, b2):
    """Pure-JAX reference mirroring the PyTorch forward (training-mode BN)."""
    add_dim = (x.ndim == 2)
    if add_dim:
        x = x[:, None, :]
    B, L, _ = x.shape
    xf = x.reshape(B * L, -1).astype(jnp.float32)
    h = xf @ w1 + b1
    mean = jnp.mean(h, axis=0, keepdims=True)
    var = jnp.mean((h - mean) ** 2, axis=0, keepdims=True)
    h = (h - mean) / jnp.sqrt(var + BN_EPS) * gamma + beta
    h = jnp.maximum(h, 0.0)
    out = h @ w2 + b2
    out = out.reshape(B, L, -1)
    if add_dim:
        out = out[:, 0, :]
    return out


if __name__ == "__main__":
    # Small shapes consistent with the module: x [B, L, in_dim].
    B, L = 2, 8
    in_dim, inner_dim, out_dim = 32, 64, 32

    key = jax.random.PRNGKey(0)
    k_x, k_w1, k_b1, k_g, k_bt, k_w2, k_b2 = jax.random.split(key, 7)

    x = jax.random.normal(k_x, (B, L, in_dim), dtype=jnp.float32)

    # Conv1d weights [out, in, 1] are stored transposed as [in, out] for matmul.
    w1 = jax.random.normal(k_w1, (in_dim, inner_dim), dtype=jnp.float32) * 0.05
    b1 = jax.random.normal(k_b1, (1, inner_dim), dtype=jnp.float32) * 0.05
    gamma = 1.0 + 0.1 * jax.random.normal(k_g, (1, inner_dim), dtype=jnp.float32)
    beta = 0.1 * jax.random.normal(k_bt, (1, inner_dim), dtype=jnp.float32)
    w2 = jax.random.normal(k_w2, (inner_dim, out_dim), dtype=jnp.float32) * 0.05
    b2 = jax.random.normal(k_b2, (1, out_dim), dtype=jnp.float32) * 0.05

    out = project_mlp_forward(x, w1, b1, gamma, beta, w2, b2)
    out = jax.block_until_ready(out)

    ref = _reference_forward(x, w1, b1, gamma, beta, w2, b2)
    assert out.shape == (B, L, out_dim), out.shape
    assert jnp.allclose(out, ref, atol=1e-4, rtol=1e-4), \
        float(jnp.max(jnp.abs(out - ref)))

    print("KERNEL_OK")
</pallas_src>

<mosaic_0001>
module attributes {stable_mosaic.version = 11 : i64} {
  func.func @_stats_kernel(%arg0: i32, %arg1: memref<16x128xf32, #tpu.memory_space<vmem>>, %arg2: memref<128x128xf32, #tpu.memory_space<vmem>>, %arg3: memref<1x128xf32, #tpu.memory_space<vmem>>) attributes {dimension_semantics = [#tpu.dimension_semantics<arbitrary>], iteration_bounds = array<i64: 1>, scalar_prefetch = 0 : i64, scratch_operands = 0 : i64, tpu.core_type = #tpu.core_type<tc>, window_params = [{transform_indices = @transform_0, window_bounds = array<i64: 16, 128>}, {pipeline_mode = #tpu.pipeline_mode<synchronous>, transform_indices = @transform_1, window_bounds = array<i64: 128, 128>}, {pipeline_mode = #tpu.pipeline_mode<synchronous>, transform_indices = @transform_2, window_bounds = array<i64: 1, 128>}]} {
    %c0_i32 = arith.constant 0 : i32
    %0 = arith.cmpi eq, %arg0, %c0_i32 : i32
    %1 = arith.extui %0 : i1 to i32
    %c0_i32_0 = arith.constant 0 : i32
    %2 = arith.cmpi ne, %1, %c0_i32_0 : i32
    scf.if %2 {
      %cst_11 = arith.constant 0.000000e+00 : f32
      %13 = vector.broadcast %cst_11 : f32 to vector<128x128xf32>
      %c0_12 = arith.constant 0 : index
      %c0_13 = arith.constant 0 : index
      %14 = vector.load %arg2[%c0_12, %c0_13] : memref<128x128xf32, #tpu.memory_space<vmem>>, vector<128x128xf32>
      tpu.vector_store %arg2[%c0_12, %c0_13], %13 {strides = array<i32>} : memref<128x128xf32, #tpu.memory_space<vmem>>, vector<128x128xf32>,
      %cst_14 = arith.constant 0.000000e+00 : f32
      %15 = vector.broadcast %cst_14 : f32 to vector<1x128xf32>
      %c0_15 = arith.constant 0 : index
      %c0_16 = arith.constant 0 : index
      %16 = vector.load %arg3[%c0_15, %c0_16] : memref<1x128xf32, #tpu.memory_space<vmem>>, vector<1x128xf32>
      tpu.vector_store %arg3[%c0_15, %c0_16], %15 {strides = array<i32>} : memref<1x128xf32, #tpu.memory_space<vmem>>, vector<1x128xf32>,
    } else {
    }
    %c0 = arith.constant 0 : index
    %c0_1 = arith.constant 0 : index
    %3 = vector.load %arg1[%c0, %c0_1] : memref<16x128xf32, #tpu.memory_space<vmem>>, vector<16x128xf32>
    %c0_2 = arith.constant 0 : index
    %c0_3 = arith.constant 0 : index
    %4 = vector.load %arg2[%c0_2, %c0_3] : memref<128x128xf32, #tpu.memory_space<vmem>>, vector<128x128xf32>
    %cst = arith.constant dense<0.000000e+00> : vector<128x128xf32>
    %5 = tpu.matmul %3, %3, %cst {dimension_numbers = #tpu.dot_dimension_numbers<[0], [0], [1], [1], [0, 1, 1, 1], [], []>} : vector<16x128xf32>, vector<16x128xf32>, vector<128x128xf32> -> vector<128x128xf32>
    %6 = arith.addf %4, %5 : vector<128x128xf32>
    %c0_4 = arith.constant 0 : index
    %c0_5 = arith.constant 0 : index
    %7 = vector.load %arg2[%c0_4, %c0_5] : memref<128x128xf32, #tpu.memory_space<vmem>>, vector<128x128xf32>
    tpu.vector_store %arg2[%c0_4, %c0_5], %6 {strides = array<i32>} : memref<128x128xf32, #tpu.memory_space<vmem>>, vector<128x128xf32>,
    %c0_6 = arith.constant 0 : index
    %c0_7 = arith.constant 0 : index
    %8 = vector.load %arg3[%c0_6, %c0_7] : memref<1x128xf32, #tpu.memory_space<vmem>>, vector<1x128xf32>
    %cst_8 = arith.constant dense<0.000000e+00> : vector<128xf32>
    %9 = vector.multi_reduction <add>, %3, %cst_8 [0] : vector<16x128xf32> to vector<128xf32>
    %10 = vector.shape_cast %9 : vector<128xf32> to vector<1x128xf32>
    %11 = arith.addf %8, %10 : vector<1x128xf32>
    %c0_9 = arith.constant 0 : index
    %c0_10 = arith.constant 0 : index
    %12 = vector.load %arg3[%c0_9, %c0_10] : memref<1x128xf32, #tpu.memory_space<vmem>>, vector<1x128xf32>
    tpu.vector_store %arg3[%c0_9, %c0_10], %11 {strides = array<i32>} : memref<1x128xf32, #tpu.memory_space<vmem>>, vector<1x128xf32>,
    return
  }
  func.func @transform_0(%arg0: i32) -> (i32, i32) {
    %c0_i32 = arith.constant 0 : i32
    %c0_i32_0 = arith.constant 0 : i32
    return %arg0, %c0_i32 : i32, i32
  }
  func.func @transform_1(%arg0: i32) -> (i32, i32) {
    %c0_i32 = arith.constant 0 : i32
    %c0_i32_0 = arith.constant 0 : i32
    %c0_i32_1 = arith.constant 0 : i32
    return %c0_i32, %c0_i32_0 : i32, i32
  }
  func.func @transform_2(%arg0: i32) -> (i32, i32) {
    %c0_i32 = arith.constant 0 : i32
    %c0_i32_0 = arith.constant 0 : i32
    %c0_i32_1 = arith.constant 0 : i32
    return %c0_i32, %c0_i32_0 : i32, i32
  }
}

module attributes {stable_mosaic.version = 11 : i64} {
  func.func @_apply_kernel(%arg0: i32, %arg1: memref<16x128xf32, #tpu.memory_space<vmem>>, %arg2: memref<128x128xf32, #tpu.memory_space<vmem>>, %arg3: memref<1x128xf32, #tpu.memory_space<vmem>>, %arg4: memref<1x128xf32, #tpu.memory_space<vmem>>, %arg5: memref<128x128xf32, #tpu.memory_space<vmem>>, %arg6: memref<1x128xf32, #tpu.memory_space<vmem>>, %arg7: memref<16x128xf32, #tpu.memory_space<vmem>>) attributes {dimension_semantics = [#tpu.dimension_semantics<parallel>], iteration_bounds = array<i64: 1>, scalar_prefetch = 0 : i64, scratch_operands = 0 : i64, tpu.core_type = #tpu.core_type<tc>, window_params = [{transform_indices = @transform_0, window_bounds = array<i64: 16, 128>}, {pipeline_mode = #tpu.pipeline_mode<synchronous>, transform_indices = @transform_1, window_bounds = array<i64: 128, 128>}, {pipeline_mode = #tpu.pipeline_mode<synchronous>, transform_indices = @transform_2, window_bounds = array<i64: 1, 128>}, {pipeline_mode = #tpu.pipeline_mode<synchronous>, transform_indices = @transform_3, window_bounds = array<i64: 1, 128>}, {pipeline_mode = #tpu.pipeline_mode<synchronous>, transform_indices = @transform_4, window_bounds = array<i64: 128, 128>}, {pipeline_mode = #tpu.pipeline_mode<synchronous>, transform_indices = @transform_5, window_bounds = array<i64: 1, 128>}, {transform_indices = @transform_6, window_bounds = array<i64: 16, 128>}]} {
    %c0 = arith.constant 0 : index
    %c0_0 = arith.constant 0 : index
    %0 = vector.load %arg1[%c0, %c0_0] : memref<16x128xf32, #tpu.memory_space<vmem>>, vector<16x128xf32>
    %c0_1 = arith.constant 0 : index
    %c0_2 = arith.constant 0 : index
    %1 = vector.load %arg2[%c0_1, %c0_2] : memref<128x128xf32, #tpu.memory_space<vmem>>, vector<128x128xf32>
    %cst = arith.constant dense<0.000000e+00> : vector<16x128xf32>
    %2 = tpu.matmul %0, %1, %cst {dimension_numbers = #tpu.dot_dimension_numbers<[1], [0], [0], [1], [0, 0, 1, 1], [], []>} : vector<16x128xf32>, vector<128x128xf32>, vector<16x128xf32> -> vector<16x128xf32>
    %c0_3 = arith.constant 0 : index
    %c0_4 = arith.constant 0 : index
    %3 = vector.load %arg3[%c0_3, %c0_4] : memref<1x128xf32, #tpu.memory_space<vmem>>, vector<1x128xf32>
    %4 = vector.broadcast %3 : vector<1x128xf32> to vector<16x128xf32>
    %5 = arith.mulf %2, %4 : vector<16x128xf32>
    %c0_5 = arith.constant 0 : index
    %c0_6 = arith.constant 0 : index
    %6 = vector.load %arg4[%c0_5, %c0_6] : memref<1x128xf32, #tpu.memory_space<vmem>>, vector<1x128xf32>
    %7 = vector.broadcast %6 : vector<1x128xf32> to vector<16x128xf32>
    %8 = arith.addf %5, %7 : vector<16x128xf32>
    %cst_7 = arith.constant 0.000000e+00 : f32
    %9 = vector.broadcast %cst_7 : f32 to vector<16x128xf32>
    %10 = arith.maximumf %8, %9 : vector<16x128xf32>
    %c0_8 = arith.constant 0 : index
    %c0_9 = arith.constant 0 : index
    %11 = vector.load %arg5[%c0_8, %c0_9] : memref<128x128xf32, #tpu.memory_space<vmem>>, vector<128x128xf32>
    %cst_10 = arith.constant dense<0.000000e+00> : vector<16x128xf32>
    %12 = tpu.matmul %10, %11, %cst_10 {dimension_numbers = #tpu.dot_dimension_numbers<[1], [0], [0], [1], [0, 0, 1, 1], [], []>} : vector<16x128xf32>, vector<128x128xf32>, vector<16x128xf32> -> vector<16x128xf32>
    %c0_11 = arith.constant 0 : index
    %c0_12 = arith.constant 0 : index
    %13 = vector.load %arg6[%c0_11, %c0_12] : memref<1x128xf32, #tpu.memory_space<vmem>>, vector<1x128xf32>
    %14 = vector.broadcast %13 : vector<1x128xf32> to vector<16x128xf32>
    %15 = arith.addf %12, %14 : vector<16x128xf32>
    %c0_13 = arith.constant 0 : index
    %c0_14 = arith.constant 0 : index
    %16 = vector.load %arg7[%c0_13, %c0_14] : memref<16x128xf32, #tpu.memory_space<vmem>>, vector<16x128xf32>
    tpu.vector_store %arg7[%c0_13, %c0_14], %15 {strides = array<i32>} : memref<16x128xf32, #tpu.memory_space<vmem>>, vector<16x128xf32>,
    return
  }
  func.func @transform_0(%arg0: i32) -> (i32, i32) {
    %c0_i32 = arith.constant 0 : i32
    %c0_i32_0 = arith.constant 0 : i32
    return %arg0, %c0_i32 : i32, i32
  }
  func.func @transform_1(%arg0: i32) -> (i32, i32) {
    %c0_i32 = arith.constant 0 : i32
    %c0_i32_0 = arith.constant 0 : i32
    %c0_i32_1 = arith.constant 0 : i32
    return %c0_i32, %c0_i32_0 : i32, i32
  }
  func.func @transform_2(%arg0: i32) -> (i32, i32) {
    %c0_i32 = arith.constant 0 : i32
    %c0_i32_0 = arith.constant 0 : i32
    %c0_i32_1 = arith.constant 0 : i32
    return %c0_i32, %c0_i32_0 : i32, i32
  }
  func.func @transform_3(%arg0: i32) -> (i32, i32) {
    %c0_i32 = arith.constant 0 : i32
    %c0_i32_0 = arith.constant 0 : i32
    %c0_i32_1 = arith.constant 0 : i32
    return %c0_i32, %c0_i32_0 : i32, i32
  }
  func.func @transform_4(%arg0: i32) -> (i32, i32) {
    %c0_i32 = arith.constant 0 : i32
    %c0_i32_0 = arith.constant 0 : i32
    %c0_i32_1 = arith.constant 0 : i32
    return %c0_i32, %c0_i32_0 : i32, i32
  }
  func.func @transform_5(%arg0: i32) -> (i32, i32) {
    %c0_i32 = arith.constant 0 : i32
    %c0_i32_0 = arith.constant 0 : i32
    %c0_i32_1 = arith.constant 0 : i32
    return %c0_i32, %c0_i32_0 : i32, i32
  }
  func.func @transform_6(%arg0: i32) -> (i32, i32) {
    %c0_i32 = arith.constant 0 : i32
    %c0_i32_0 = arith.constant 0 : i32
    return %arg0, %c0_i32 : i32, i32
  }
}

</mosaic_0001>

<llo_original>
// kernel: project_mlp_forward.3
$region0: #{project_mlp_forward.3}
  #allocation0 [shape = 'u32[]', space=smem, size = 0x4, offset = 0x4, fixed_abs, tag = 'smem constant byte address 0x4 - core index']
  #allocation1 [shape = 'u32[144,128]{1,0:T(1,128)}', space=vmem, size = 0x12000, scoped, tag = 'internal scratch']
  %s0 = inlined_call_operand.vmem [shape: f32[16,128], index: 0, kind: input, shape index: {}]
  %s1 = inlined_call_operand.vmem [shape: f32[128,128], index: 1, kind: input, shape index: {}]
  %s2 = inlined_call_operand.vmem [shape: f32[1,128], index: 2, kind: input, shape index: {}]
  %s3 = inlined_call_operand.vmem [shape: f32[1,128], index: 3, kind: input, shape index: {}]
  %s4 = inlined_call_operand.vmem [shape: f32[128,128], index: 4, kind: input, shape index: {}]
  %s5 = inlined_call_operand.vmem [shape: f32[1,128], index: 5, kind: input, shape index: {}]
  %s6 = inlined_call_operand.vmem [shape: f32[16,128], index: 6, kind: output, shape index: {}]
  %s7 = sld [smem:[#allocation0]]
  $region34: #{project_mlp_forward.3} parent=0
    _
  %s9 = ssub.s32 1, %s7
  %s10 = scalar_select 0, %s9, %s7
  // Predicated region
  $region2: #{project_mlp_forward.3} parent=0 // pred_check
    _
  $region3: #{project_mlp_forward.3} parent=0 // pred_check_branch
    %12 = sbr.rel (0) target = $region5
  $region4: #{project_mlp_forward.3} parent=0 // pred_region
    _
  $region5: #{project_mlp_forward.3} parent=0 // pred_fallthru
    _
  // Predicated region
  $region6: #{project_mlp_forward.3} parent=0 // pred_check
    _
  $region7: #{project_mlp_forward.3} parent=0 // pred_check_branch
    %14 = sbr.rel (0) target = $region9
  $region8: #{project_mlp_forward.3} parent=0 // pred_region
    _
  $region9: #{project_mlp_forward.3} parent=0 // pred_fallthru
    _
  // Predicated region
  $region10: #{project_mlp_forward.3} parent=0 // pred_check
    _
  $region11: #{project_mlp_forward.3} parent=0 // pred_check_branch
    %16 = sbr.rel (0) target = $region13
  $region12: #{project_mlp_forward.3} parent=0 // pred_region
    _
  $region13: #{project_mlp_forward.3} parent=0 // pred_fallthru
    _
  // Predicated region
  $region14: #{project_mlp_forward.3} parent=0 // pred_check
    _
  $region15: #{project_mlp_forward.3} parent=0 // pred_check_branch
    %18 = sbr.rel (0) target = $region17
  $region16: #{project_mlp_forward.3} parent=0 // pred_region
    _
  $region17: #{project_mlp_forward.3} parent=0 // pred_fallthru
    _
  // Predicated region
  $region18: #{project_mlp_forward.3} parent=0 // pred_check
    _
  $region19: #{project_mlp_forward.3} parent=0 // pred_check_branch
    %20 = sbr.rel (0) target = $region21
  $region20: #{project_mlp_forward.3} parent=0 // pred_region
    _
  $region21: #{project_mlp_forward.3} parent=0 // pred_fallthru
    _
  // Predicated region
  $region22: #{project_mlp_forward.3} parent=0 // pred_check
    _
  $region23: #{project_mlp_forward.3} parent=0 // pred_check_branch
    %22 = sbr.rel (0) target = $region25
  $region24: #{project_mlp_forward.3} parent=0 // pred_region
    _
  $region25: #{project_mlp_forward.3} parent=0 // pred_fallthru
    _
  %v23 = vld [vmem:[%s0] sm:$0xff]
  %v24 = vld [vmem:[%s0 + $0x8] sm:$0xff]
  %v25 = vld [vmem:[%s1] sm:$0xff]
  %v26 = vld [vmem:[%s1 + $0x8] sm:$0xff]
  %v27 = vld [vmem:[%s1 + $0x10] sm:$0xff]
  %v28 = vld [vmem:[%s1 + $0x18] sm:$0xff]
  %v29 = vld [vmem:[%s1 + $0x20] sm:$0xff]
  %v30 = vld [vmem:[%s1 + $0x28] sm:$0xff]
  %v31 = vld [vmem:[%s1 + $0x30] sm:$0xff]
  %v32 = vld [vmem:[%s1 + $0x38] sm:$0xff]
  %v33 = vld [vmem:[%s1 + $0x40] sm:$0xff]
  %v34 = vld [vmem:[%s1 + $0x48] sm:$0xff]
  %v35 = vld [vmem:[%s1 + $0x50] sm:$0xff]
  %v36 = vld [vmem:[%s1 + $0x58] sm:$0xff]
  %v37 = vld [vmem:[%s1 + $0x60] sm:$0xff]
  %v38 = vld [vmem:[%s1 + $0x68] sm:$0xff]
  %v39 = vld [vmem:[%s1 + $0x70] sm:$0xff]
  %v40 = vld [vmem:[%s1 + $0x78] sm:$0xff]
  %41 = vmatprep.subr.mxu0 0.0
  %42 = vmatpush1.msra.mxu0 %v25
  %43 = vmatprep.subr.mxu0 0.0
  %44 = vmatpush1.msra.mxu0 %v26
  %45 = vmatprep.subr.mxu0 0.0
  %46 = vmatpush1.msra.mxu0 %v27
  %47 = vmatprep.subr.mxu0 0.0
  %48 = vmatpush1.msra.mxu0 %v28
  %49 = vmatprep.subr.mxu0 0.0
  %50 = vmatpush1.msra.mxu0 %v29
  %51 = vmatprep.subr.mxu0 0.0
  %52 = vmatpush1.msra.mxu0 %v30
  %53 = vmatprep.subr.mxu0 0.0
  %54 = vmatpush1.msra.mxu0 %v31
  %55 = vmatprep.subr.mxu0 0.0
  %56 = vmatpush1.msra.mxu0 %v32
  %57 = vmatprep.subr.mxu0 0.0
  %58 = vmatpush1.msra.mxu0 %v33
  %59 = vmatprep.subr.mxu0 0.0
  %60 = vmatpush1.msra.mxu0 %v34
  %61 = vmatprep.subr.mxu0 0.0
  %62 = vmatpush1.msra.mxu0 %v35
  %63 = vmatprep.subr.mxu0 0.0
  %64 = vmatpush1.msra.mxu0 %v36
  %65 = vmatprep.subr.mxu0 0.0
  %66 = vmatpush1.msra.mxu0 %v37
  %67 = vmatprep.subr.mxu0 0.0
  %68 = vmatpush1.msra.mxu0 %v38
  %69 = vmatprep.subr.mxu0 0.0
  %70 = vmatpush1.msra.mxu0 %v39
  %71 = vmatprep.subr.mxu0 0.0
  %72 = vmatpush1.msra.mxu0 %v40
  %73 = vmatprep.subr.mxu0 0.0
  %74 = vmatpush1.msra.mxu0 0.0
  %75 = vmatprep.subr.mxu0 0.0
  %76 = vmatpush1.msra.mxu0 0.0
  %77 = vmatprep.subr.mxu0 0.0
  %78 = vmatpush1.msra.mxu0 0.0
  %79 = vmatprep.subr.mxu0 0.0
  %80 = vmatpush1.msra.mxu0 0.0
  %81 = vmatprep.subr.mxu0 0.0
  %82 = vmatpush1.msra.mxu0 0.0
  %83 = vmatprep.subr.mxu0 0.0
  %84 = vmatpush1.msra.mxu0 0.0
  %85 = vmatprep.subr.mxu0 0.0
  %86 = vmatpush1.msra.mxu0 0.0
  %87 = vmatprep.subr.mxu0 0.0
  %88 = vmatpush1.msra.mxu0 0.0
  %89 = vmatprep.subr.mxu0 0.0
  %90 = vmatpush1.msra.mxu0 0.0
  %91 = vmatprep.subr.mxu0 0.0
  %92 = vmatpush1.msra.mxu0 0.0
  %93 = vmatprep.subr.mxu0 0.0
  %94 = vmatpush1.msra.mxu0 0.0
  %95 = vmatprep.subr.mxu0 0.0
  %96 = vmatpush1.msra.mxu0 0.0
  %97 = vmatprep.subr.mxu0 0.0
  %98 = vmatpush1.msra.mxu0 0.0
  %99 = vmatprep.subr.mxu0 0.0
  %100 = vmatpush1.msra.mxu0 0.0
  %101 = vmatprep.subr.mxu0 0.0
  %102 = vmatpush1.msra.mxu0 0.0
  %103 = vmatprep.subr.mxu0 0.0
  %104 = vmatpush1.msra.mxu0 0.0
  %105 = vmatprep.mubr.f32.mxu0 0.0
  %106 = vmatmul.mubr.f32.gmra.mrb[0].mxu0 %v23
  %v107 = vpop.f32.mrb[0].mxu0
  %v108 = vadd.f32 0.0, %v107
  %v109 = vpop.f32.mrb[0].mxu0
  %110 = vmatprep.mubr.f32.mxu0 0.0
  %111 = vmatmul.mubr.f32.gmra.mrb[0].mxu0 %v24
  %v112 = vpop.f32.mrb[0].mxu0
  %v113 = vadd.f32 0.0, %v112
  %v114 = vpop.f32.mrb[0].mxu0
  %115 = vdwg.mxu0
  %v116 = vld [vmem:[%s2] sm:$0x1]
  %v118 = vlaneseq
  %v119 = vshrl.u32 %v118, 7
  %v120 = vsub.s32 0, %v119
  %v121 = vrot.slane %v116, %v120
  %v123 = vmul.f32 %v108, %v121
  %v124 = vmul.f32 %v113, %v121
  %v125 = vld [vmem:[%s3] sm:$0x1]
  %v127 = vlaneseq
  %v128 = vshrl.u32 %v127, 7
  %v129 = vsub.s32 0, %v128
  %v130 = vrot.slane %v125, %v129
  %v132 = vadd.f32 %v123, %v130
  %v133 = vadd.f32 %v124, %v130
  %v134 = vmax.f32 %v132, 0.0
  %v135 = vmax.f32 %v133, 0.0
  %v136 = vld [vmem:[%s4] sm:$0xff]
  %v137 = vld [vmem:[%s4 + $0x8] sm:$0xff]
  %v138 = vld [vmem:[%s4 + $0x10] sm:$0xff]
  %v139 = vld [vmem:[%s4 + $0x18] sm:$0xff]
  %v140 = vld [vmem:[%s4 + $0x20] sm:$0xff]
  %v141 = vld [vmem:[%s4 + $0x28] sm:$0xff]
  %v142 = vld [vmem:[%s4 + $0x30] sm:$0xff]
  %v143 = vld [vmem:[%s4 + $0x38] sm:$0xff]
  %v144 = vld [vmem:[%s4 + $0x40] sm:$0xff]
  %v145 = vld [vmem:[%s4 + $0x48] sm:$0xff]
  %v146 = vld [vmem:[%s4 + $0x50] sm:$0xff]
  %v147 = vld [vmem:[%s4 + $0x58] sm:$0xff]
  %v148 = vld [vmem:[%s4 + $0x60] sm:$0xff]
  %v149 = vld [vmem:[%s4 + $0x68] sm:$0xff]
  %v150 = vld [vmem:[%s4 + $0x70] sm:$0xff]
  %v151 = vld [vmem:[%s4 + $0x78] sm:$0xff]
  %v152 = vld [vmem:[%s5] sm:$0x1]
  %v154 = vlaneseq
  %v155 = vshrl.u32 %v154, 7
  %v156 = vsub.s32 0, %v155
  %v157 = vrot.slane %v152, %v156
  %159 = vmatprep.subr.mxu0 0.0
  %160 = vmatpush1.msra.mxu0 %v136
  %161 = vmatprep.subr.mxu0 0.0
  %162 = vmatpush1.msra.mxu0 %v137
  %163 = vmatprep.subr.mxu0 0.0
  %164 = vmatpush1.msra.mxu0 %v138
  %165 = vmatprep.subr.mxu0 0.0
  %166 = vmatpush1.msra.mxu0 %v139
  %167 = vmatprep.subr.mxu0 0.0
  %168 = vmatpush1.msra.mxu0 %v140
  %169 = vmatprep.subr.mxu0 0.0
  %170 = vmatpush1.msra.mxu0 %v141
  %171 = vmatprep.subr.mxu0 0.0
  %172 = vmatpush1.msra.mxu0 %v142
  %173 = vmatprep.subr.mxu0 0.0
  %174 = vmatpush1.msra.mxu0 %v143
  %175 = vmatprep.subr.mxu0 0.0
  %176 = vmatpush1.msra.mxu0 %v144
  %177 = vmatprep.subr.mxu0 0.0
  %178 = vmatpush1.msra.mxu0 %v145
  %179 = vmatprep.subr.mxu0 0.0
  %180 = vmatpush1.msra.mxu0 %v146
  %181 = vmatprep.subr.mxu0 0.0
  %182 = vmatpush1.msra.mxu0 %v147
  %183 = vmatprep.subr.mxu0 0.0
  %184 = vmatpush1.msra.mxu0 %v148
  %185 = vmatprep.subr.mxu0 0.0
  %186 = vmatpush1.msra.mxu0 %v149
  %187 = vmatprep.subr.mxu0 0.0
  %188 = vmatpush1.msra.mxu0 %v150
  %189 = vmatprep.subr.mxu0 0.0
  %190 = vmatpush1.msra.mxu0 %v151
  %191 = vmatprep.subr.mxu0 0.0
  %192 = vmatpush1.msra.mxu0 0.0
  %193 = vmatprep.subr.mxu0 0.0
  %194 = vmatpush1.msra.mxu0 0.0
  %195 = vmatprep.subr.mxu0 0.0
  %196 = vmatpush1.msra.mxu0 0.0
  %197 = vmatprep.subr.mxu0 0.0
  %198 = vmatpush1.msra.mxu0 0.0
  %199 = vmatprep.subr.mxu0 0.0
  %200 = vmatpush1.msra.mxu0 0.0
  %201 = vmatprep.subr.mxu0 0.0
  %202 = vmatpush1.msra.mxu0 0.0
  %203 = vmatprep.subr.mxu0 0.0
  %204 = vmatpush1.msra.mxu0 0.0
  %205 = vmatprep.subr.mxu0 0.0
  %206 = vmatpush1.msra.mxu0 0.0
  %207 = vmatprep.subr.mxu0 0.0
  %208 = vmatpush1.msra.mxu0 0.0
  %209 = vmatprep.subr.mxu0 0.0
  %210 = vmatpush1.msra.mxu0 0.0
  %211 = vmatprep.subr.mxu0 0.0
  %212 = vmatpush1.msra.mxu0 0.0
  %213 = vmatprep.subr.mxu0 0.0
  %214 = vmatpush1.msra.mxu0 0.0
  %215 = vmatprep.subr.mxu0 0.0
  %216 = vmatpush1.msra.mxu0 0.0
  %217 = vmatprep.subr.mxu0 0.0
  %218 = vmatpush1.msra.mxu0 0.0
  %219 = vmatprep.subr.mxu0 0.0
  %220 = vmatpush1.msra.mxu0 0.0
  %221 = vmatprep.subr.mxu0 0.0
  %222 = vmatpush1.msra.mxu0 0.0
  %223 = vmatprep.mubr.f32.mxu0 0.0
  %224 = vmatmul.mubr.f32.gmra.mrb[0].mxu0 %v134
  %v225 = vpop.f32.mrb[0].mxu0
  %v226 = vadd.f32 %v157, %v225
  %v227 = vpop.f32.mrb[0].mxu0
  %228 = vmatprep.mubr.f32.mxu0 0.0
  %229 = vmatmul.mubr.f32.gmra.mrb[0].mxu0 %v135
  %v230 = vpop.f32.mrb[0].mxu0
  %v231 = vadd.f32 %v157, %v230
  %v232 = vpop.f32.mrb[0].mxu0
  %233 = vdwg.mxu0
  %234 = vst [vmem:[%s6] sm:$0xff] %v226
  %235 = vst [vmem:[%s6 + $0x8] sm:$0xff] %v231
  // Predicated region
  $region26: #{project_mlp_forward.3} parent=0 // pred_check
    _
  $region27: #{project_mlp_forward.3} parent=0 // pred_check_branch
    %237 = sbr.rel (0) target = $region29
  $region28: #{project_mlp_forward.3} parent=0 // pred_region
    _
  $region29: #{project_mlp_forward.3} parent=0 // pred_fallthru
    _
  // Predicated region
  $region30: #{project_mlp_forward.3} parent=0 // pred_check
    _
  $region31: #{project_mlp_forward.3} parent=0 // pred_check_branch
    %239 = sbr.rel (0) target = $region33
  $region32: #{project_mlp_forward.3} parent=0 // pred_region
    _
  $region33: #{project_mlp_forward.3} parent=0 // pred_fallthru
    _

// kernel: project_mlp_forward.2
$region0: #{project_mlp_forward.2}
  #allocation0 [shape = 'u32[]', space=smem, size = 0x4, offset = 0x4, fixed_abs, tag = 'smem constant byte address 0x4 - core index']
  #allocation1 [shape = 'u32[144,128]{1,0:T(1,128)}', space=vmem, size = 0x12000, scoped, tag = 'internal scratch']
  %s0 = inlined_call_operand.vmem [shape: f32[16,128], index: 0, kind: input, shape index: {}]
  %s1 = inlined_call_operand.vmem [shape: f32[128,128], index: 1, kind: output, shape index: {0}]
  %s2 = inlined_call_operand.vmem [shape: f32[1,128], index: 2, kind: output, shape index: {1}]
  %3 = xla_tuple %s1, %s2
  %s4 = sld [smem:[#allocation0]]
  $region26: #{project_mlp_forward.2} parent=0
    _
  %s6 = ssub.s32 1, %s4
  %s7 = scalar_select 0, %s6, %s4
  // Predicated region
  $region2: #{project_mlp_forward.2} parent=0 // pred_check
    _
  $region3: #{project_mlp_forward.2} parent=0 // pred_check_branch
    %9 = sbr.rel (0) target = $region5
  $region4: #{project_mlp_forward.2} parent=0 // pred_region
    _
  $region5: #{project_mlp_forward.2} parent=0 // pred_fallthru
    _
  %p10 = scmp.eq.s32.totalorder 0, 0
  // Predicated region
  $region6: #{project_mlp_forward.2} parent=0 // pred_check
    %p11 = pneg %p10
  $region7: #{project_mlp_forward.2} parent=0 // pred_check_branch
    %13 = sbr.rel (%p11) target = $region9
  $region8: #{project_mlp_forward.2} parent=0 // pred_region
    %14 = vst [vmem:[%s1] sm:$0xff] 0.0
    %15 = vst [vmem:[%s1 + $0x8] sm:$0xff] 0.0
    %16 = vst [vmem:[%s1 + $0x10] sm:$0xff] 0.0
    %17 = vst [vmem:[%s1 + $0x18] sm:$0xff] 0.0
    %18 = vst [vmem:[%s1 + $0x20] sm:$0xff] 0.0
    %19 = vst [vmem:[%s1 + $0x28] sm:$0xff] 0.0
    %20 = vst [vmem:[%s1 + $0x30] sm:$0xff] 0.0
    %21 = vst [vmem:[%s1 + $0x38] sm:$0xff] 0.0
    %22 = vst [vmem:[%s1 + $0x40] sm:$0xff] 0.0
    %23 = vst [vmem:[%s1 + $0x48] sm:$0xff] 0.0
    %24 = vst [vmem:[%s1 + $0x50] sm:$0xff] 0.0
    %25 = vst [vmem:[%s1 + $0x58] sm:$0xff] 0.0
    %26 = vst [vmem:[%s1 + $0x60] sm:$0xff] 0.0
    %27 = vst [vmem:[%s1 + $0x68] sm:$0xff] 0.0
    %28 = vst [vmem:[%s1 + $0x70] sm:$0xff] 0.0
    %29 = vst [vmem:[%s1 + $0x78] sm:$0xff] 0.0
    %30 = vst [vmem:[%s2] sm:$0x1] 0.0
  $region9: #{project_mlp_forward.2} parent=0 // pred_fallthru
    _
  %v31 = vld [vmem:[%s0] sm:$0xff]
  %v32 = vld [vmem:[%s0 + $0x8] sm:$0xff]
  %v33 = vld [vmem:[%s1] sm:$0xff]
  %v34 = vld [vmem:[%s1 + $0x8] sm:$0xff]
  %v35 = vld [vmem:[%s1 + $0x10] sm:$0xff]
  %v36 = vld [vmem:[%s1 + $0x18] sm:$0xff]
  %v37 = vld [vmem:[%s1 + $0x20] sm:$0xff]
  %v38 = vld [vmem:[%s1 + $0x28] sm:$0xff]
  %v39 = vld [vmem:[%s1 + $0x30] sm:$0xff]
  %v40 = vld [vmem:[%s1 + $0x38] sm:$0xff]
  %v41 = vld [vmem:[%s1 + $0x40] sm:$0xff]
  %v42 = vld [vmem:[%s1 + $0x48] sm:$0xff]
  %v43 = vld [vmem:[%s1 + $0x50] sm:$0xff]
  %v44 = vld [vmem:[%s1 + $0x58] sm:$0xff]
  %v45 = vld [vmem:[%s1 + $0x60] sm:$0xff]
  %v46 = vld [vmem:[%s1 + $0x68] sm:$0xff]
  %v47 = vld [vmem:[%s1 + $0x70] sm:$0xff]
  %v48 = vld [vmem:[%s1 + $0x78] sm:$0xff]
  %49 = vxpose.xlu0.b32.start [1/16] %v31, 128
  %50 = vxpose.xlu0.b32.cont [2/16] %v32, 128
  %51 = vxpose.xlu0.b32.cont [3/16] 0.0, 128
  %52 = vxpose.xlu0.b32.cont [4/16] 0.0, 128
  %53 = vxpose.xlu0.b32.cont [5/16] 0.0, 128
  %54 = vxpose.xlu0.b32.cont [6/16] 0.0, 128
  %55 = vxpose.xlu0.b32.cont [7/16] 0.0, 128
  %56 = vxpose.xlu0.b32.cont [8/16] 0.0, 128
  %57 = vxpose.xlu0.b32.cont [9/16] 0.0, 128
  %58 = vxpose.xlu0.b32.cont [10/16] 0.0, 128
  %59 = vxpose.xlu0.b32.cont [11/16] 0.0, 128
  %60 = vxpose.xlu0.b32.cont [12/16] 0.0, 128
  %61 = vxpose.xlu0.b32.cont [13/16] 0.0, 128
  %62 = vxpose.xlu0.b32.cont [14/16] 0.0, 128
  %63 = vxpose.xlu0.b32.cont [15/16] 0.0, 128
  %64 = vxpose.xlu0.b32.end [16/16] 0.0, 128
  %v65 = vpop.trf.xlu0
  %v66 = vpop.trf.xlu0
  %v67 = vpop.trf.xlu0
  %v68 = vpop.trf.xlu0
  %v69 = vpop.trf.xlu0
  %v70 = vpop.trf.xlu0
  %v71 = vpop.trf.xlu0
  %v72 = vpop.trf.xlu0
  %v73 = vpop.trf.xlu0
  %v74 = vpop.trf.xlu0
  %v75 = vpop.trf.xlu0
  %v76 = vpop.trf.xlu0
  %v77 = vpop.trf.xlu0
  %v78 = vpop.trf.xlu0
  %v79 = vpop.trf.xlu0
  %v80 = vpop.trf.xlu0
  %vm81 = vcmask 130048
  %v83 = vsel %vm81, %v65, 0
  %v86 = vsel %vm81, %v66, 0
  %v89 = vsel %vm81, %v67, 0
  %v92 = vsel %vm81, %v68, 0
  %v95 = vsel %vm81, %v69, 0
  %v98 = vsel %vm81, %v70, 0
  %v101 = vsel %vm81, %v71, 0
  %v104 = vsel %vm81, %v72, 0
  %v107 = vsel %vm81, %v73, 0
  %v110 = vsel %vm81, %v74, 0
  %v113 = vsel %vm81, %v75, 0
  %v116 = vsel %vm81, %v76, 0
  %v119 = vsel %vm81, %v77, 0
  %v122 = vsel %vm81, %v78, 0
  %v125 = vsel %vm81, %v79, 0
  %v128 = vsel %vm81, %v80, 0
  %130 = vmatprep.subr.mxu0 0.0
  %131 = vmatpush1.msra.mxu0 %v31
  %132 = vmatprep.subr.mxu0 0.0
  %133 = vmatpush1.msra.mxu0 %v32
  %134 = vmatprep.subr.mxu0 0.0
  %135 = vmatpush1.msra.mxu0 0.0
  %136 = vmatprep.subr.mxu0 0.0
  %137 = vmatpush1.msra.mxu0 0.0
  %138 = vmatprep.subr.mxu0 0.0
  %139 = vmatpush1.msra.mxu0 0.0
  %140 = vmatprep.subr.mxu0 0.0
  %141 = vmatpush1.msra.mxu0 0.0
  %142 = vmatprep.subr.mxu0 0.0
  %143 = vmatpush1.msra.mxu0 0.0
  %144 = vmatprep.subr.mxu0 0.0
  %145 = vmatpush1.msra.mxu0 0.0
  %146 = vmatprep.subr.mxu0 0.0
  %147 = vmatpush1.msra.mxu0 0.0
  %148 = vmatprep.subr.mxu0 0.0
  %149 = vmatpush1.msra.mxu0 0.0
  %150 = vmatprep.subr.mxu0 0.0
  %151 = vmatpush1.msra.mxu0 0.0
  %152 = vmatprep.subr.mxu0 0.0
  %153 = vmatpush1.msra.mxu0 0.0
  %154 = vmatprep.subr.mxu0 0.0
  %155 = vmatpush1.msra.mxu0 0.0
  %156 = vmatprep.subr.mxu0 0.0
  %157 = vmatpush1.msra.mxu0 0.0
  %158 = vmatprep.subr.mxu0 0.0
  %159 = vmatpush1.msra.mxu0 0.0
  %160 = vmatprep.subr.mxu0 0.0
  %161 = vmatpush1.msra.mxu0 0.0
  %162 = vmatprep.subr.mxu0 0.0
  %163 = vmatpush1.msra.mxu0 0.0
  %164 = vmatprep.subr.mxu0 0.0
  %165 = vmatpush1.msra.mxu0 0.0
  %166 = vmatprep.subr.mxu0 0.0
  %167 = vmatpush1.msra.mxu0 0.0
  %168 = vmatprep.subr.mxu0 0.0
  %169 = vmatpush1.msra.mxu0 0.0
  %170 = vmatprep.subr.mxu0 0.0
  %171 = vmatpush1.msra.mxu0 0.0
  %172 = vmatprep.subr.mxu0 0.0
  %173 = vmatpush1.msra.mxu0 0.0
  %174 = vmatprep.subr.mxu0 0.0
  %175 = vmatpush1.msra.mxu0 0.0
  %176 = vmatprep.subr.mxu0 0.0
  %177 = vmatpush1.msra.mxu0 0.0
  %178 = vmatprep.subr.mxu0 0.0
  %179 = vmatpush1.msra.mxu0 0.0
  %180 = vmatprep.subr.mxu0 0.0
  %181 = vmatpush1.msra.mxu0 0.0
  %182 = vmatprep.subr.mxu0 0.0
  %183 = vmatpush1.msra.mxu0 0.0
  %184 = vmatprep.subr.mxu0 0.0
  %185 = vmatpush1.msra.mxu0 0.0
  %186 = vmatprep.subr.mxu0 0.0
  %187 = vmatpush1.msra.mxu0 0.0
  %188 = vmatprep.subr.mxu0 0.0
  %189 = vmatpush1.msra.mxu0 0.0
  %190 = vmatprep.subr.mxu0 0.0
  %191 = vmatpush1.msra.mxu0 0.0
  %192 = vmatprep.subr.mxu0 0.0
  %193 = vmatpush1.msra.mxu0 0.0
  %194 = vmatprep.mubr.f32.mxu0 0.0
  %195 = vmatmul.mubr.f32.gmra.mrb[0].mxu0 %v83
  %v196 = vpop.f32.mrb[0].mxu0
  %v197 = vadd.f32 0.0, %v196
  %v198 = vpop.f32.mrb[0].mxu0
  %199 = vmatprep.mubr.f32.mxu0 0.0
  %200 = vmatmul.mubr.f32.gmra.mrb[0].mxu0 %v86
  %v201 = vpop.f32.mrb[0].mxu0
  %v202 = vadd.f32 0.0, %v201
  %v203 = vpop.f32.mrb[0].mxu0
  %204 = vmatprep.mubr.f32.mxu0 0.0
  %205 = vmatmul.mubr.f32.gmra.mrb[0].mxu0 %v89
  %v206 = vpop.f32.mrb[0].mxu0
  %v207 = vadd.f32 0.0, %v206
  %v208 = vpop.f32.mrb[0].mxu0
  %209 = vmatprep.mubr.f32.mxu0 0.0
  %210 = vmatmul.mubr.f32.gmra.mrb[0].mxu0 %v92
  %v211 = vpop.f32.mrb[0].mxu0
  %v212 = vadd.f32 0.0, %v211
  %v213 = vpop.f32.mrb[0].mxu0
  %214 = vmatprep.mubr.f32.mxu0 0.0
  %215 = vmatmul.mubr.f32.gmra.mrb[0].mxu0 %v95
  %v216 = vpop.f32.mrb[0].mxu0
  %v217 = vadd.f32 0.0, %v216
  %v218 = vpop.f32.mrb[0].mxu0
  %219 = vmatprep.mubr.f32.mxu0 0.0
  %220 = vmatmul.mubr.f32.gmra.mrb[0].mxu0 %v98
  %v221 = vpop.f32.mrb[0].mxu0
  %v222 = vadd.f32 0.0, %v221
  %v223 = vpop.f32.mrb[0].mxu0
  %224 = vmatprep.mubr.f32.mxu0 0.0
  %225 = vmatmul.mubr.f32.gmra.mrb[0].mxu0 %v101
  %v226 = vpop.f32.mrb[0].mxu0
  %v227 = vadd.f32 0.0, %v226
  %v228 = vpop.f32.mrb[0].mxu0
  %229 = vmatprep.mubr.f32.mxu0 0.0
  %230 = vmatmul.mubr.f32.gmra.mrb[0].mxu0 %v104
  %v231 = vpop.f32.mrb[0].mxu0
  %v232 = vadd.f32 0.0, %v231
  %v233 = vpop.f32.mrb[0].mxu0
  %234 = vmatprep.mubr.f32.mxu0 0.0
  %235 = vmatmul.mubr.f32.gmra.mrb[0].mxu0 %v107
  %v236 = vpop.f32.mrb[0].mxu0
  %v237 = vadd.f32 0.0, %v236
  %v238 = vpop.f32.mrb[0].mxu0
  %239 = vmatprep.mubr.f32.mxu0 0.0
  %240 = vmatmul.mubr.f32.gmra.mrb[0].mxu0 %v110
  %v241 = vpop.f32.mrb[0].mxu0
  %v242 = vadd.f32 0.0, %v241
  %v243 = vpop.f32.mrb[0].mxu0
  %244 = vmatprep.mubr.f32.mxu0 0.0
  %245 = vmatmul.mubr.f32.gmra.mrb[0].mxu0 %v113
  %v246 = vpop.f32.mrb[0].mxu0
  %v247 = vadd.f32 0.0, %v246
  %v248 = vpop.f32.mrb[0].mxu0
  %249 = vmatprep.mubr.f32.mxu0 0.0
  %250 = vmatmul.mubr.f32.gmra.mrb[0].mxu0 %v116
  %v251 = vpop.f32.mrb[0].mxu0
  %v252 = vadd.f32 0.0, %v251
  %v253 = vpop.f32.mrb[0].mxu0
  %254 = vmatprep.mubr.f32.mxu0 0.0
  %255 = vmatmul.mubr.f32.gmra.mrb[0].mxu0 %v119
  %v256 = vpop.f32.mrb[0].mxu0
  %v257 = vadd.f32 0.0, %v256
  %v258 = vpop.f32.mrb[0].mxu0
  %259 = vmatprep.mubr.f32.mxu0 0.0
  %260 = vmatmul.mubr.f32.gmra.mrb[0].mxu0 %v122
  %v261 = vpop.f32.mrb[0].mxu0
  %v262 = vadd.f32 0.0, %v261
  %v263 = vpop.f32.mrb[0].mxu0
  %264 = vmatprep.mubr.f32.mxu0 0.0
  %265 = vmatmul.mubr.f32.gmra.mrb[0].mxu0 %v125
  %v266 = vpop.f32.mrb[0].mxu0
  %v267 = vadd.f32 0.0, %v266
  %v268 = vpop.f32.mrb[0].mxu0
  %269 = vmatprep.mubr.f32.mxu0 0.0
  %270 = vmatmul.mubr.f32.gmra.mrb[0].mxu0 %v128
  %v271 = vpop.f32.mrb[0].mxu0
  %v272 = vadd.f32 0.0, %v271
  %v273 = vpop.f32.mrb[0].mxu0
  %274 = vdwg.mxu0
  %v275 = vadd.f32 %v33, %v197
  %v276 = vadd.f32 %v34, %v202
  %v277 = vadd.f32 %v35, %v207
  %v278 = vadd.f32 %v36, %v212
  %v279 = vadd.f32 %v37, %v217
  %v280 = vadd.f32 %v38, %v222
  %v281 = vadd.f32 %v39, %v227
  %v282 = vadd.f32 %v40, %v232
  %v283 = vadd.f32 %v41, %v237
  %v284 = vadd.f32 %v42, %v242
  %v285 = vadd.f32 %v43, %v247
  %v286 = vadd.f32 %v44, %v252
  %v287 = vadd.f32 %v45, %v257
  %v288 = vadd.f32 %v46, %v262
  %v289 = vadd.f32 %v47, %v267
  %v290 = vadd.f32 %v48, %v272
  %291 = vst [vmem:[%s1] sm:$0xff] %v275
  %292 = vst [vmem:[%s1 + $0x8] sm:$0xff] %v276
  %293 = vst [vmem:[%s1 + $0x10] sm:$0xff] %v277
  %294 = vst [vmem:[%s1 + $0x18] sm:$0xff] %v278
  %295 = vst [vmem:[%s1 + $0x20] sm:$0xff] %v279
  %296 = vst [vmem:[%s1 + $0x28] sm:$0xff] %v280
  %297 = vst [vmem:[%s1 + $0x30] sm:$0xff] %v281
  %298 = vst [vmem:[%s1 + $0x38] sm:$0xff] %v282
  %299 = vst [vmem:[%s1 + $0x40] sm:$0xff] %v283
  %300 = vst [vmem:[%s1 + $0x48] sm:$0xff] %v284
  %301 = vst [vmem:[%s1 + $0x50] sm:$0xff] %v285
  %302 = vst [vmem:[%s1 + $0x58] sm:$0xff] %v286
  %303 = vst [vmem:[%s1 + $0x60] sm:$0xff] %v287
  %304 = vst [vmem:[%s1 + $0x68] sm:$0xff] %v288
  %305 = vst [vmem:[%s1 + $0x70] sm:$0xff] %v289
  %306 = vst [vmem:[%s1 + $0x78] sm:$0xff] %v290
  %v307 = vld [vmem:[%s2] sm:$0x1]
  %v308 = vadd.f32 %v31, %v32
  %v309 = vrot.slane %v308, 4
  %v310 = vadd.f32 %v308, %v309
  %v311 = vrot.slane %v310, 2
  %v312 = vadd.f32 %v310, %v311
  %v313 = vrot.slane %v312, 1
  %v314 = vadd.f32 %v312, %v313
  %v315 = vadd.f32 %v307, %v314
  %316 = vst [vmem:[%s2] sm:$0x1] %v315
  // Predicated region
  $region10: #{project_mlp_forward.2} parent=0 // pred_check
    _
  $region11: #{project_mlp_forward.2} parent=0 // pred_check_branch
    %318 = sbr.rel (0) target = $region13
  $region12: #{project_mlp_forward.2} parent=0 // pred_region
    _
  $region13: #{project_mlp_forward.2} parent=0 // pred_fallthru
    _
  // Predicated region
  $region14: #{project_mlp_forward.2} parent=0 // pred_check
    _
  $region15: #{project_mlp_forward.2} parent=0 // pred_check_branch
    %320 = sbr.rel (0) target = $region17
  $region16: #{project_mlp_forward.2} parent=0 // pred_region
    _
  $region17: #{project_mlp_forward.2} parent=0 // pred_fallthru
    _
  // Predicated region
  $region18: #{project_mlp_forward.2} parent=0 // pred_check
    _
  $region19: #{project_mlp_forward.2} parent=0 // pred_check_branch
    %322 = sbr.rel (0) target = $region21
  $region20: #{project_mlp_forward.2} parent=0 // pred_region
    _
  $region21: #{project_mlp_forward.2} parent=0 // pred_fallthru
    _
  // Predicated region
  $region22: #{project_mlp_forward.2} parent=0 // pred_check
    _
  $region23: #{project_mlp_forward.2} parent=0 // pred_check_branch
    %324 = sbr.rel (0) target = $region25
  $region24: #{project_mlp_forward.2} parent=0 // pred_region
    _
  $region25: #{project_mlp_forward.2} parent=0 // pred_fallthru
    _

</llo_original>
